<compile_context>
chip_gen: v6e
topology: v6e:2x2x1
jax: 0.10.0
libtpu: 0.0.40
codegen_flags: <defaults>
</compile_context>

<pallas_src>
import functools

import jax
import jax.numpy as jnp
from jax.experimental import pallas as pl
from jax.experimental.pallas import tpu as pltpu


LANE = 128          # vreg lane width
SUBLANE = 8         # vreg sublane count (f32)
MAX_TILE_ROWS = 2048  # (2048, 128) f32 block = 1 MiB per buffer


def _cdiv(a, b):
    return (a + b - 1) // b


def _round_up(x, m):
    return _cdiv(x, m) * m


# ----------------------------------------------------------------------------- kernel

def _scaler_kernel(rate, x_ref, o_ref):
    # Training-mode HeteroFL scaler: out = x / rate.
    # `rate` is a compile-time Python float, folded directly into the op.
    o_ref[...] = x_ref[...] / rate


# ----------------------------------------------------------------------------- wrapper

def scaler_forward(x, rate, training=True):
    """Forward of HeteroFL Scaler: x / rate in training mode, identity in eval mode."""
    if not training:
        # PyTorch eval path is literally `return feature`; no kernel launch needed.
        return x

    orig_shape = x.shape
    total = int(x.size)
    if total == 0:
        return x

    # Lane-dense 2-D view: (rows, 128) with rows a multiple of the sublane count.
    rows = _cdiv(total, LANE)
    tile_rows = min(_round_up(rows, SUBLANE), MAX_TILE_ROWS)
    rows_padded = _round_up(rows, tile_rows)
    padded_total = rows_padded * LANE

    flat = x.reshape(-1)
    if padded_total != total:
        flat = jnp.pad(flat, (0, padded_total - total))
    x2 = flat.reshape(rows_padded, LANE)

    grid = (rows_padded // tile_rows,)
    out2 = pl.pallas_call(
        functools.partial(_scaler_kernel, float(rate)),
        out_shape=jax.ShapeDtypeStruct((rows_padded, LANE), x.dtype),
        grid=grid,
        in_specs=[pl.BlockSpec((tile_rows, LANE), lambda i: (i, 0))],
        out_specs=pl.BlockSpec((tile_rows, LANE), lambda i: (i, 0)),
        compiler_params=pltpu.CompilerParams(
            dimension_semantics=("parallel",)),
    )(x2)

    out = out2.reshape(-1)
    if padded_total != total:
        out = out[:total]
    return out.reshape(orig_shape)


def make_scaler(rate, training):
    """Build a jitted callable mirroring Scaler(rate) in the given mode."""
    return jax.jit(functools.partial(scaler_forward, rate=rate, training=training))


# ----------------------------------------------------------------------------- main

if __name__ == "__main__":
    key = jax.random.PRNGKey(0)
    k1, k2 = jax.random.split(key)

    rate = 0.5
    # Feature map as the module would see it inside MobileNetV3: NCHW.
    x = jax.random.normal(k1, (2, 4, 16, 16), jnp.float32)

    train_fn = make_scaler(rate, training=True)
    eval_fn = make_scaler(rate, training=False)

    y_train = train_fn(x)
    y_eval = eval_fn(x)
    jax.block_until_ready((y_train, y_eval))

    assert y_train.shape == x.shape, y_train.shape
    assert y_eval.shape == x.shape, y_eval.shape
    assert bool(jnp.allclose(y_train, x / rate, rtol=1e-6, atol=0.0))
    assert bool(jnp.array_equal(y_eval, x))      # eval mode is exact identity

    # Exercise the ragged / padded path too (element count not a multiple of 8*128).
    x_odd = jax.random.normal(k2, (3, 5, 7), jnp.float32)
    y_odd = jax.jit(functools.partial(scaler_forward, rate=0.25, training=True))(x_odd)
    jax.block_until_ready(y_odd)
    assert y_odd.shape == x_odd.shape
    assert bool(jnp.allclose(y_odd, x_odd / 0.25, rtol=1e-6, atol=0.0))

    assert bool(jnp.all(jnp.isfinite(y_train)))
    print("KERNEL_OK")
</pallas_src>

<mosaic_0001>
module attributes {stable_mosaic.version = 11 : i64} {
  func.func @_scaler_kernel(%arg0: i32, %arg1: memref<16x128xf32, #tpu.memory_space<vmem>>, %arg2: memref<16x128xf32, #tpu.memory_space<vmem>>) attributes {dimension_semantics = [#tpu.dimension_semantics<parallel>], iteration_bounds = array<i64: 1>, scalar_prefetch = 0 : i64, scratch_operands = 0 : i64, tpu.core_type = #tpu.core_type<tc>, window_params = [{transform_indices = @transform_0, window_bounds = array<i64: 16, 128>}, {transform_indices = @transform_1, window_bounds = array<i64: 16, 128>}]} {
    %c0 = arith.constant 0 : index
    %c0_0 = arith.constant 0 : index
    %0 = vector.load %arg1[%c0, %c0_0] : memref<16x128xf32, #tpu.memory_space<vmem>>, vector<16x128xf32>
    %cst = arith.constant 5.000000e-01 : f32
    %1 = vector.broadcast %cst : f32 to vector<16x128xf32>
    %2 = arith.divf %0, %1 : vector<16x128xf32>
    %c0_1 = arith.constant 0 : index
    %c0_2 = arith.constant 0 : index
    %3 = vector.load %arg2[%c0_1, %c0_2] : memref<16x128xf32, #tpu.memory_space<vmem>>, vector<16x128xf32>
    tpu.vector_store %arg2[%c0_1, %c0_2], %2 {strides = array<i32>} : memref<16x128xf32, #tpu.memory_space<vmem>>, vector<16x128xf32>,
    return
  }
  func.func @transform_0(%arg0: i32) -> (i32, i32) {
    %c0_i32 = arith.constant 0 : i32
    %c0_i32_0 = arith.constant 0 : i32
    return %arg0, %c0_i32 : i32, i32
  }
  func.func @transform_1(%arg0: i32) -> (i32, i32) {
    %c0_i32 = arith.constant 0 : i32
    %c0_i32_0 = arith.constant 0 : i32
    return %arg0, %c0_i32 : i32, i32
  }
}

</mosaic_0001>

<llo_original>
// kernel: scaler_forward.1
$region0: #{scaler_forward.1}
  #allocation0 [shape = 'u32[]', space=smem, size = 0x4, offset = 0x4, fixed_abs, tag = 'smem constant byte address 0x4 - core index']
  #allocation1 [shape = 'u32[144,128]{1,0:T(1,128)}', space=vmem, size = 0x12000, scoped, tag = 'internal scratch']
  %s0 = inlined_call_operand.vmem [shape: f32[16,128], index: 0, kind: input, shape index: {}]
  %s1 = inlined_call_operand.vmem [shape: f32[16,128], index: 1, kind: output, shape index: {}]
  %s2 = sld [smem:[#allocation0]]
  $region14: #{scaler_forward.1} parent=0
    _
  %s4 = ssub.s32 1, %s2
  %s5 = scalar_select 0, %s4, %s2
  // Predicated region
  $region2: #{scaler_forward.1} parent=0 // pred_check
    _
  $region3: #{scaler_forward.1} parent=0 // pred_check_branch
    %7 = sbr.rel (0) target = $region5
  $region4: #{scaler_forward.1} parent=0 // pred_region
    _
  $region5: #{scaler_forward.1} parent=0 // pred_fallthru
    _
  %v8 = vld [vmem:[%s0] sm:$0xff]
  %v9 = vld [vmem:[%s0 + $0x8] sm:$0xff]
  %v10 = vrcp.pop 0.5
  %v11 = vmul.f32 %v8, %v10
  %v12 = vmul.f32 %v9, %v10
  %13 = vst [vmem:[%s1] sm:$0xff] %v11
  %14 = vst [vmem:[%s1 + $0x8] sm:$0xff] %v12
  // Predicated region
  $region6: #{scaler_forward.1} parent=0 // pred_check
    _
  $region7: #{scaler_forward.1} parent=0 // pred_check_branch
    %16 = sbr.rel (0) target = $region9
  $region8: #{scaler_forward.1} parent=0 // pred_region
    _
  $region9: #{scaler_forward.1} parent=0 // pred_fallthru
    _
  // Predicated region
  $region10: #{scaler_forward.1} parent=0 // pred_check
    _
  $region11: #{scaler_forward.1} parent=0 // pred_check_branch
    %18 = sbr.rel (0) target = $region13
  $region12: #{scaler_forward.1} parent=0 // pred_region
    _
  $region13: #{scaler_forward.1} parent=0 // pred_fallthru
    _

</llo_original>
